<compile_context>
chip_gen: v6e
topology: v6e:2x2x1
jax: 0.10.0
libtpu: 0.0.40
codegen_flags: <defaults>
</compile_context>

<pallas_src>
import functools
import math

import jax
import jax.numpy as jnp
from jax.experimental import pallas as pl
from jax.experimental.pallas import tpu as pltpu


# ------------------------------ fused kernel --------------------------------

def _time_predicter_kernel(x_ref, w0_ref, b0_ref, w1_ref, b1_ref, o_ref):
    """One packed row tile of Linear -> ReLU -> Linear.

    x_ref  : (tm_p, PF)   packed rows, PF = pack * num_feats (lane-dense)
    w0_ref : (PF, PF)     block-diagonal W0^T, compute dtype (bf16 or f32)
    b0_ref : (1, PF)      tiled first-layer bias, f32
    w1_ref : (PF, pack)   block-diagonal W1^T, f32
    b1_ref : (1, 1)       second-layer bias scalar, SMEM
    o_ref  : (tm_p, pack) packed outputs, f32
    """
    # h = relu(x @ W0^T + b0) -- hidden activation never touches HBM.
    h = jnp.dot(x_ref[...], w0_ref[...], preferred_element_type=jnp.float32)
    h = jnp.maximum(h + b0_ref[...], 0.0)            # bias + ReLU in f32 (VPU)
    # y = h @ W1^T + b1  (small N=pack dot, f32)
    y = jnp.dot(h, w1_ref[...], preferred_element_type=jnp.float32)
    o_ref[...] = y + b1_ref[0, 0]


# -------------------------------- wrapper ------------------------------------

@functools.partial(jax.jit, static_argnames=("block_rows",))
def time_predicter_forward(x, w0, b0, w1, b1, *, block_rows=2048):
    """x: (..., num_feats) -> (..., 1), matching TimePredicter.forward.

    Dtype-preserving: x / W0 are fed to the MXU in the caller's dtype (pass
    bf16 for ~2x less HBM traffic); accumulation, bias, ReLU and the output
    are f32.
    """
    lead = x.shape[:-1]
    f_in = x.shape[-1]
    n_out = w1.shape[0]
    assert n_out == 1, "TimePredicter hard-codes out_features=1"

    m = math.prod(lead) if lead else 1
    if m == 0:
        return jnp.zeros((*lead, 1), jnp.float32)

    cdt = x.dtype                              # keep caller dtype into the MXU
    x2 = x.reshape(m, f_in)

    # ---- 128-lane feature packing -------------------------------------------
    pack = 128 // f_in if (f_in < 128 and 128 % f_in == 0) else 1
    if m % pack:                               # <= pack-1 rows, rarely triggers
        x2 = jnp.pad(x2, ((0, pack - m % pack), (0, 0)))
    mp = x2.shape[0] // pack                   # packed row count
    pf = pack * f_in
    xp = x2.reshape(mp, pf)                    # free: rows are contiguous

    # Block-diagonal weights keep the `pack` interleaved rows independent.
    eye = jnp.eye(pack, dtype=jnp.float32)
    w0bd = jnp.kron(eye, w0.T.astype(jnp.float32)).astype(cdt)   # (pf, pf)
    w1bd = jnp.kron(eye, w1.T.astype(jnp.float32))               # (pf, pack) f32
    b0t = jnp.tile(b0.astype(jnp.float32), pack).reshape(1, pf)  # (1, pf)
    b1s = b1.astype(jnp.float32).reshape(1, 1)                   # SMEM scalar

    # ---- row tiling over packed rows -----------------------------------------
    tpk = max(block_rows // pack, 8)
    if mp <= tpk:
        tm_p = mp                              # single full tile (any size)
    else:
        tm_p = (tpk // 8) * 8                  # (8,128)-aligned sublane count
    grid = (pl.cdiv(mp, tm_p),)                # partial last tile handled by
                                               # Pallas OOB masking (no pad copy)

    out = pl.pallas_call(
        _time_predicter_kernel,
        out_shape=jax.ShapeDtypeStruct((mp, pack), jnp.float32),
        grid_spec=pltpu.PrefetchScalarGridSpec(
            num_scalar_prefetch=0,
            grid=grid,
            in_specs=[
                pl.BlockSpec((tm_p, pf), lambda i: (i, 0)),     # x row tile
                pl.BlockSpec((pf, pf), lambda i: (0, 0)),       # block-diag W0^T
                pl.BlockSpec((1, pf), lambda i: (0, 0)),        # tiled b0
                pl.BlockSpec((pf, pack), lambda i: (0, 0)),     # block-diag W1^T
                pl.BlockSpec(memory_space=pltpu.MemorySpace.SMEM),  # b1 scalar
            ],
            out_specs=pl.BlockSpec((tm_p, pack), lambda i: (i, 0)),
        ),
        compiler_params=pltpu.CompilerParams(
            dimension_semantics=("parallel",)),   # shards tiles across v7x TCs
    )(xp, w0bd, b0t, w1bd, b1s)

    # Row-major flatten of (mp, pack) restores the original row order.
    return out.reshape(-1)[:m].reshape(*lead, 1)


# ---------------------------- pure-JAX reference ------------------------------

def forward_ref(x, w0, b0, w1, b1):
    h = jnp.maximum(x @ w0.T + b0, 0.0)
    return h @ w1.T + b1


# ----------------------------------- main -------------------------------------

if __name__ == "__main__":
    batch, seq, num_feats = 8, 32, 32    # 256 rows -> 64 packed 128-lane rows
    out_features = 1

    key = jax.random.PRNGKey(0)
    k_x, k_w0, k_w1, k_b0, k_b1 = jax.random.split(key, 5)

    x = jax.random.normal(k_x, (batch, seq, num_feats), jnp.float32)

    # kaiming_normal_-style init (fan_in = num_feats, gain = sqrt(2)).
    std0 = (2.0 / num_feats) ** 0.5
    w0 = std0 * jax.random.normal(k_w0, (num_feats, num_feats), jnp.float32)
    w1 = std0 * jax.random.normal(k_w1, (out_features, num_feats), jnp.float32)
    # Module inits biases to zero; small random biases exercise the bias path.
    b0 = 0.1 * jax.random.normal(k_b0, (num_feats,), jnp.float32)
    b1 = 0.1 * jax.random.normal(k_b1, (out_features,), jnp.float32)

    # f32 run; block_rows=128 at this tiny demo size gives grid=(2,) so the
    # multi-tile ("parallel") path is exercised.  Real sizes use the default
    # block_rows=2048.
    out = time_predicter_forward(x, w0, b0, w1, b1, block_rows=128)
    out = jax.block_until_ready(out)
    ref = forward_ref(x, w0, b0, w1, b1)
    assert out.shape == (batch, seq, out_features), out.shape
    assert jnp.allclose(out, ref, rtol=1e-4, atol=1e-4), \
        float(jnp.max(jnp.abs(out - ref)))

    # bf16 run (halves the HBM read of x; bf16 straight into the MXU,
    # f32 accumulation / bias / ReLU).  Compared against an f32 reference of
    # the bf16-quantized inputs.
    xb = x.astype(jnp.bfloat16)
    w0b = w0.astype(jnp.bfloat16)
    w1b = w1.astype(jnp.bfloat16)
    out_bf = time_predicter_forward(xb, w0b, b0, w1b, b1)
    out_bf = jax.block_until_ready(out_bf)
    ref_bf = forward_ref(xb.astype(jnp.float32), w0b.astype(jnp.float32), b0,
                         w1b.astype(jnp.float32), b1)
    assert out_bf.shape == (batch, seq, out_features), out_bf.shape
    assert jnp.allclose(out_bf, ref_bf, rtol=2e-2, atol=2e-2), \
        float(jnp.max(jnp.abs(out_bf - ref_bf)))

    print("KERNEL_OK")
</pallas_src>

<mosaic_0001>
module attributes {stable_mosaic.version = 11 : i64} {
  func.func @_time_predicter_kernel(%arg0: i32, %arg1: memref<32x128xf32, #tpu.memory_space<vmem>>, %arg2: memref<128x128xf32, #tpu.memory_space<vmem>>, %arg3: memref<1x128xf32, #tpu.memory_space<vmem>>, %arg4: memref<128x4xf32, #tpu.memory_space<vmem>>, %arg5: memref<1x1xf32, #tpu.memory_space<smem>>, %arg6: memref<32x4xf32, #tpu.memory_space<vmem>>) attributes {dimension_semantics = [#tpu.dimension_semantics<parallel>], iteration_bounds = array<i64: 2>, scalar_prefetch = 0 : i64, scratch_operands = 0 : i64, tpu.core_type = #tpu.core_type<tc>, window_params = [{transform_indices = @transform_0, window_bounds = array<i64: 32, 128>}, {pipeline_mode = #tpu.pipeline_mode<synchronous>, transform_indices = @transform_1, window_bounds = array<i64: 128, 128>}, {pipeline_mode = #tpu.pipeline_mode<synchronous>, transform_indices = @transform_2, window_bounds = array<i64: 1, 128>}, {pipeline_mode = #tpu.pipeline_mode<synchronous>, transform_indices = @transform_3, window_bounds = array<i64: 128, 4>}, {transform_indices = @transform_4, window_bounds = array<i64: 1, 1>}, {transform_indices = @transform_5, window_bounds = array<i64: 32, 4>}]} {
    %c0 = arith.constant 0 : index
    %c0_0 = arith.constant 0 : index
    %0 = vector.load %arg1[%c0, %c0_0] : memref<32x128xf32, #tpu.memory_space<vmem>>, vector<32x128xf32>
    %c0_1 = arith.constant 0 : index
    %c0_2 = arith.constant 0 : index
    %1 = vector.load %arg2[%c0_1, %c0_2] : memref<128x128xf32, #tpu.memory_space<vmem>>, vector<128x128xf32>
    %cst = arith.constant dense<0.000000e+00> : vector<32x128xf32>
    %2 = tpu.matmul %0, %1, %cst {dimension_numbers = #tpu.dot_dimension_numbers<[1], [0], [0], [1], [0, 0, 1, 1], [], []>} : vector<32x128xf32>, vector<128x128xf32>, vector<32x128xf32> -> vector<32x128xf32>
    %c0_3 = arith.constant 0 : index
    %c0_4 = arith.constant 0 : index
    %3 = vector.load %arg3[%c0_3, %c0_4] : memref<1x128xf32, #tpu.memory_space<vmem>>, vector<1x128xf32>
    %4 = vector.broadcast %3 : vector<1x128xf32> to vector<32x128xf32>
    %5 = arith.addf %2, %4 : vector<32x128xf32>
    %cst_5 = arith.constant 0.000000e+00 : f32
    %6 = vector.broadcast %cst_5 : f32 to vector<32x128xf32>
    %7 = arith.maximumf %5, %6 : vector<32x128xf32>
    %c0_6 = arith.constant 0 : index
    %c0_7 = arith.constant 0 : index
    %8 = vector.load %arg4[%c0_6, %c0_7] : memref<128x4xf32, #tpu.memory_space<vmem>>, vector<128x4xf32>
    %cst_8 = arith.constant dense<0.000000e+00> : vector<32x4xf32>
    %9 = tpu.matmul %7, %8, %cst_8 {dimension_numbers = #tpu.dot_dimension_numbers<[1], [0], [0], [1], [0, 0, 1, 1], [], []>} : vector<32x128xf32>, vector<128x4xf32>, vector<32x4xf32> -> vector<32x4xf32>
    %c0_9 = arith.constant 0 : index
    %c0_10 = arith.constant 0 : index
    %10 = memref.load %arg5[%c0_9, %c0_10] : memref<1x1xf32, #tpu.memory_space<smem>>
    %11 = vector.broadcast %10 : f32 to vector<32x4xf32>
    %12 = arith.addf %9, %11 : vector<32x4xf32>
    %c0_11 = arith.constant 0 : index
    %c0_12 = arith.constant 0 : index
    %13 = vector.load %arg6[%c0_11, %c0_12] : memref<32x4xf32, #tpu.memory_space<vmem>>, vector<32x4xf32>
    tpu.vector_store %arg6[%c0_11, %c0_12], %12 {strides = array<i32>} : memref<32x4xf32, #tpu.memory_space<vmem>>, vector<32x4xf32>,
    return
  }
  func.func @transform_0(%arg0: i32) -> (i32, i32) {
    %c0_i32 = arith.constant 0 : i32
    %c0_i32_0 = arith.constant 0 : i32
    return %arg0, %c0_i32 : i32, i32
  }
  func.func @transform_1(%arg0: i32) -> (i32, i32) {
    %c0_i32 = arith.constant 0 : i32
    %c0_i32_0 = arith.constant 0 : i32
    %c0_i32_1 = arith.constant 0 : i32
    return %c0_i32, %c0_i32_0 : i32, i32
  }
  func.func @transform_2(%arg0: i32) -> (i32, i32) {
    %c0_i32 = arith.constant 0 : i32
    %c0_i32_0 = arith.constant 0 : i32
    %c0_i32_1 = arith.constant 0 : i32
    return %c0_i32, %c0_i32_0 : i32, i32
  }
  func.func @transform_3(%arg0: i32) -> (i32, i32) {
    %c0_i32 = arith.constant 0 : i32
    %c0_i32_0 = arith.constant 0 : i32
    %c0_i32_1 = arith.constant 0 : i32
    return %c0_i32, %c0_i32_0 : i32, i32
  }
  func.func @transform_4(%arg0: i32) -> (i32, i32) {
    %c0_i32 = arith.constant 0 : i32
    %c0_i32_0 = arith.constant 0 : i32
    %c0_i32_1 = arith.constant 0 : i32
    return %c0_i32, %c0_i32_0 : i32, i32
  }
  func.func @transform_5(%arg0: i32) -> (i32, i32) {
    %c0_i32 = arith.constant 0 : i32
    %c0_i32_0 = arith.constant 0 : i32
    return %arg0, %c0_i32 : i32, i32
  }
}

</mosaic_0001>

<llo_original>
// kernel: tile.9
$region0: #{tile.9}
  %s0 = inlined_call_operand.vmem [shape: f32[4,32], index: 0, kind: input, shape index: {}]
  %s1 = inlined_call_operand.vmem [shape: f32[1,128], index: 1, kind: output, shape index: {}]
  $region1: #{tile.9} parent=0
    #allocation0 [shape = 'u8[4096]{0}', space=vmem, size = 0x1000, scoped, tag = 'scoped mem for output reshape']
    #allocation1 [shape = 'u8[4096]{0}', space=vmem, size = 0x1000, scoped, tag = 'scoped mem for input reshape']
    %s3 = sshll.u32 1, 4
    %s4 = ssub.s32 %s3, 1
    %v5 = vld [vmem:[%s0] sm:%s4]
    %6 = vst [vmem:[#allocation1] sm:%s4] %v5
    %v7 = vld [vmem:[#allocation1] sm:$0x1]
    %vm8 = vcmask 261120
    %9 = vst.msk [vmem:[#allocation0] sm:$0x1] %vm8, %v7
    %s10 = scalar_lea.vmem [#allocation1], 3
    %v11 = vld [vmem:[%s10] sm:$0x1]
    %12 = vrot.lane.b32.xlu0 %v11, 96
    %v13 = vpop.permute.xlu0 %12
    %vm14 = vcmask 1048320
    %15 = vst.msk [vmem:[#allocation0] sm:$0x1] %vm14, %v13
    %s16 = scalar_lea.vmem [#allocation1], 2
    %v17 = vld [vmem:[%s16] sm:$0x1]
    %18 = vrot.lane.b32.xlu0 %v17, 64
    %v19 = vpop.permute.xlu0 %18
    %vm20 = vcmask 785920
    %21 = vst.msk [vmem:[#allocation0] sm:$0x1] %vm20, %v19
    %s22 = scalar_lea.vmem [#allocation1], 1
    %v23 = vld [vmem:[%s22] sm:$0x1]
    %24 = vrot.lane.b32.xlu0 %v23, 32
    %v25 = vpop.permute.xlu0 %24
    %vm26 = vcmask 523520
    %27 = vst.msk [vmem:[#allocation0] sm:$0x1] %vm26, %v25
    %s29 = sshll.u32 1, 1
    %s30 = ssub.s32 %s29, 1
    %v32 = vld [vmem:[#allocation0] sm:%s30]
    %s33 = sshll.u32 1, 1
    %s34 = ssub.s32 %s33, 1
    %35 = vst [vmem:[%s1] sm:%s34] %v32

// kernel: time_predicter_forward.1
$region0: #{time_predicter_forward.1}
  #allocation0 [shape = 'u32[]', space=smem, size = 0x4, offset = 0x4, fixed_abs, tag = 'smem constant byte address 0x4 - core index']
  #allocation1 [shape = 'u32[144,128]{1,0:T(1,128)}', space=vmem, size = 0x12000, scoped, tag = 'internal scratch']
  #allocation2 [shape = 'f32[1,1]{1,0:T(1,128)S(6)}', space=smem, size = 0x200, scoped, tag = 'scoped memory for time_predicter_forward.1']
  %s0 = inlined_call_operand.vmem [shape: f32[64,128], index: 0, kind: input, shape index: {}]
  %s1 = inlined_call_operand.vmem [shape: f32[128,128], index: 1, kind: input, shape index: {}]
  %s2 = inlined_call_operand.vmem [shape: f32[1,128], index: 2, kind: input, shape index: {}]
  %s3 = inlined_call_operand.vmem [shape: f32[128,4], index: 3, kind: input, shape index: {}]
  %s4 = inlined_call_operand.<no memory space> [shape: f32[1,1], index: 4, kind: input, shape index: {}]
  %s5 = inlined_call_operand.vmem [shape: f32[64,4], index: 5, kind: output, shape index: {}]
  %s6 = sld [smem:[#allocation0]]
  $region53: #{time_predicter_forward.1} parent=0
    _
  %s8 = ssub.s32 1, %s6
  %s9 = scalar_select 0, %s8, %s6
  %10 = sst [smem:[#allocation2]] %s4
  loop: start=0, step=1, limit=4
  $region2: #{time_predicter_forward.1} parent=0 // loop_pre_header
    _
  $region3: #{time_predicter_forward.1} parent=0 // loop_header
    %s12 = sphi 0, %s16
    %p13 = scmp.ge.s32.totalorder %s12, 4
    %s22 = sphi 0, %s24
    %s25 = sphi 0, %s22
    %s26 = sphi 0, %s25
    %s42 = sphi 0, %s26
    %s46 = sphi 0, %s46
    %s48 = sphi 0, %s46
    %s49 = sphi 0, %s48
    %s63 = sphi 0, %s49
    %s67 = sphi 0, %s67
    %s69 = sphi 0, %s67
    %s70 = sphi 0, %s69
    %s84 = sphi 0, %s70
    %s88 = sphi 0, %s88
    %s90 = sphi 0, %s88
    %s91 = sphi 0, %s90
    %s105 = sphi 0, %s91
    %s109 = sphi 0, %s109
    %s111 = sphi 0, %s109
    %s112 = sphi 0, %s111
    %s126 = sphi 0, %s112
    %s132 = sphi 0, %s134
    %s135 = sphi 0, %s132
    %s136 = sphi 0, %s135
    %s152 = sphi 0, %s136
  $region4: #{time_predicter_forward.1} parent=0 // loop_header_branch
    %15 = sbr.rel (%p13) target = $region8
  $region5: #{time_predicter_forward.1} parent=0 // loop_body
    %s17 = ssub.s32 %s12, 1
    %s18 = ssub.s32 %s12, 2
    %s19 = sadd.s32 %s12, 1
    %s20 = ssub.s32 %s12, %s19
    %p21 = scmp.eq.s32.totalorder %s20, 0
    %s23 = sadd.s32 %s22, 1
    %s24 = scalar_select %p21, %s22, %s23
    %p27 = pneg %p21
    %p28 = scmp.eq.s32.totalorder %s12, 1
    %p29 = por %p27, %p28
    %p30 = scmp.ne.s32.totalorder %s22, %s25
    %p31 = scmp.eq.s32.totalorder %s12, 0
    %p32 = por %p30, %p31
    %p33 = scmp.ne.s32.totalorder %s22, %s25
    %p34 = scmp.eq.s32.totalorder %s17, 1
    %p35 = por %p33, %p34
    %p36 = scmp.ne.s32.totalorder %s25, %s26
    %p37 = scmp.eq.s32.totalorder %s17, 0
    %p38 = por %p36, %p37
    %p39 = scmp.ne.s32.totalorder %s25, %s26
    %p40 = scmp.eq.s32.totalorder %s18, 1
    %p41 = por %p39, %p40
    %p43 = scmp.ne.s32.totalorder %s26, %s42
    %p44 = scmp.eq.s32.totalorder %s18, 0
    %p45 = por %p43, %p44
    %s47 = sadd.s32 %s46, 1
    %p50 = scmp.eq.s32.totalorder %s12, 1
    %p51 = scmp.ne.s32.totalorder %s46, %s48
    %p52 = scmp.eq.s32.totalorder %s12, 0
    %p53 = por %p51, %p52
    %p54 = scmp.ne.s32.totalorder %s46, %s48
    %p55 = scmp.eq.s32.totalorder %s17, 1
    %p56 = por %p54, %p55
    %p57 = scmp.ne.s32.totalorder %s48, %s49
    %p58 = scmp.eq.s32.totalorder %s17, 0
    %p59 = por %p57, %p58
    %p60 = scmp.ne.s32.totalorder %s48, %s49
    %p61 = scmp.eq.s32.totalorder %s18, 1
    %p62 = por %p60, %p61
    %p64 = scmp.ne.s32.totalorder %s49, %s63
    %p65 = scmp.eq.s32.totalorder %s18, 0
    %p66 = por %p64, %p65
    %s68 = sadd.s32 %s67, 1
    %p71 = scmp.eq.s32.totalorder %s12, 1
    %p72 = scmp.ne.s32.totalorder %s67, %s69
    %p73 = scmp.eq.s32.totalorder %s12, 0
    %p74 = por %p72, %p73
    %p75 = scmp.ne.s32.totalorder %s67, %s69
    %p76 = scmp.eq.s32.totalorder %s17, 1
    %p77 = por %p75, %p76
    %p78 = scmp.ne.s32.totalorder %s69, %s70
    %p79 = scmp.eq.s32.totalorder %s17, 0
    %p80 = por %p78, %p79
    %p81 = scmp.ne.s32.totalorder %s69, %s70
    %p82 = scmp.eq.s32.totalorder %s18, 1
    %p83 = por %p81, %p82
    %p85 = scmp.ne.s32.totalorder %s70, %s84
    %p86 = scmp.eq.s32.totalorder %s18, 0
    %p87 = por %p85, %p86
    %s89 = sadd.s32 %s88, 1
    %p92 = scmp.eq.s32.totalorder %s12, 1
    %p93 = scmp.ne.s32.totalorder %s88, %s90
    %p94 = scmp.eq.s32.totalorder %s12, 0
    %p95 = por %p93, %p94
    %p96 = scmp.ne.s32.totalorder %s88, %s90
    %p97 = scmp.eq.s32.totalorder %s17, 1
    %p98 = por %p96, %p97
    %p99 = scmp.ne.s32.totalorder %s90, %s91
    %p100 = scmp.eq.s32.totalorder %s17, 0
    %p101 = por %p99, %p100
    %p102 = scmp.ne.s32.totalorder %s90, %s91
    %p103 = scmp.eq.s32.totalorder %s18, 1
    %p104 = por %p102, %p103
    %p106 = scmp.ne.s32.totalorder %s91, %s105
    %p107 = scmp.eq.s32.totalorder %s18, 0
    %p108 = por %p106, %p107
    %s110 = sadd.s32 %s109, 1
    %p113 = scmp.eq.s32.totalorder %s12, 1
    %p114 = scmp.ne.s32.totalorder %s109, %s111
    %p115 = scmp.eq.s32.totalorder %s12, 0
    %p116 = por %p114, %p115
    %p117 = scmp.ne.s32.totalorder %s109, %s111
    %p118 = scmp.eq.s32.totalorder %s17, 1
    %p119 = por %p117, %p118
    %p120 = scmp.ne.s32.totalorder %s111, %s112
    %p121 = scmp.eq.s32.totalorder %s17, 0
    %p122 = por %p120, %p121
    %p123 = scmp.ne.s32.totalorder %s111, %s112
    %p124 = scmp.eq.s32.totalorder %s18, 1
    %p125 = por %p123, %p124
    %p127 = scmp.ne.s32.totalorder %s112, %s126
    %p128 = scmp.eq.s32.totalorder %s18, 0
    %p129 = por %p127, %p128
    %s130 = ssub.s32 %s12, %s19
    %p131 = scmp.eq.s32.totalorder %s130, 0
    %s133 = sadd.s32 %s132, 1
    %s134 = scalar_select %p131, %s132, %s133
    %p137 = pneg %p131
    %p138 = scmp.eq.s32.totalorder %s12, 1
    %p139 = por %p137, %p138
    %p140 = scmp.ne.s32.totalorder %s132, %s135
    %p141 = scmp.eq.s32.totalorder %s12, 0
    %p142 = por %p140, %p141
    %p143 = scmp.ne.s32.totalorder %s132, %s135
    %p144 = scmp.eq.s32.totalorder %s17, 1
    %p145 = por %p143, %p144
    %p146 = scmp.ne.s32.totalorder %s135, %s136
    %p147 = scmp.eq.s32.totalorder %s17, 0
    %p148 = por %p146, %p147
    %p149 = scmp.ne.s32.totalorder %s135, %s136
    %p150 = scmp.eq.s32.totalorder %s18, 1
    %p151 = por %p149, %p150
    %p153 = scmp.ne.s32.totalorder %s136, %s152
    %p154 = scmp.eq.s32.totalorder %s18, 0
    %p155 = por %p153, %p154
    %p156 = scmp.le.s32.totalorder 1, %s12
    %p157 = scmp.lt.s32.totalorder %s12, 3
    %p158 = pnand %p156, %p157
    %p159 = pneg %p158
    // Predicated region
    $region9: #{time_predicter_forward.1} parent=5 // pred_check
      _
    $region10: #{time_predicter_forward.1} parent=5 // pred_check_branch
      %161 = sbr.rel (%p158) target = $region12
    $region11: #{time_predicter_forward.1} parent=5 // pred_region
      %s162 = ssub.s32 %s12, 1
      // Predicated region
      $region13: #{time_predicter_forward.1} parent=11 // pred_check
        %p163 = pneg %p59
      $region14: #{time_predicter_forward.1} parent=11 // pred_check_branch
        %165 = sbr.rel (%p163) target = $region16
      $region15: #{time_predicter_forward.1} parent=11 // pred_region
        _
      $region16: #{time_predicter_forward.1} parent=11 // pred_fallthru
        _
      // Predicated region
      $region17: #{time_predicter_forward.1} parent=11 // pred_check
        %p166 = pneg %p80
      $region18: #{time_predicter_forward.1} parent=11 // pred_check_branch
        %168 = sbr.rel (%p166) target = $region20
      $region19: #{time_predicter_forward.1} parent=11 // pred_region
        _
      $region20: #{time_predicter_forward.1} parent=11 // pred_fallthru
        _
      // Predicated region
      $region21: #{time_predicter_forward.1} parent=11 // pred_check
        %p169 = pneg %p101
      $region22: #{time_predicter_forward.1} parent=11 // pred_check_branch
        %171 = sbr.rel (%p169) target = $region24
      $region23: #{time_predicter_forward.1} parent=11 // pred_region
        _
      $region24: #{time_predicter_forward.1} parent=11 // pred_fallthru
        _
      // Predicated region
      $region25: #{time_predicter_forward.1} parent=11 // pred_check
        %p172 = pneg %p122
      $region26: #{time_predicter_forward.1} parent=11 // pred_check_branch
        %174 = sbr.rel (%p172) target = $region28
      $region27: #{time_predicter_forward.1} parent=11 // pred_region
        _
      $region28: #{time_predicter_forward.1} parent=11 // pred_fallthru
        _
    $region12: #{time_predicter_forward.1} parent=5 // pred_fallthru
      _
    %p175 = scmp.lt.s32.totalorder %s12, 2
    // Predicated region
    $region29: #{time_predicter_forward.1} parent=5 // pred_check
      %p176 = pneg %p175
    $region30: #{time_predicter_forward.1} parent=5 // pred_check_branch
      %178 = sbr.rel (%p176) target = $region32
    $region31: #{time_predicter_forward.1} parent=5 // pred_region
      // Predicated region
      $region33: #{time_predicter_forward.1} parent=31 // pred_check
        %p179 = pneg %p32
      $region34: #{time_predicter_forward.1} parent=31 // pred_check_branch
        %181 = sbr.rel (%p179) target = $region36
      $region35: #{time_predicter_forward.1} parent=31 // pred_region
        %s182 = smul.u32 4, %s12
        %p183 = scmp.lt.s32.totalorder %s182, 7
        %s184 = scalar_select %p183, %s182, 7
        %s185 = smul.addr %s184, 8
        %s186 = scalar_lea.vmem %s0, %s185
        %s187 = smul.u32 4, %s12
      $region36: #{time_predicter_forward.1} parent=31 // pred_fallthru
        _
    $region32: #{time_predicter_forward.1} parent=5 // pred_fallthru
      _
    %p188 = scmp.le.s32.totalorder 1, %s12
    %p189 = scmp.lt.s32.totalorder %s12, 3
    %p190 = pnand %p188, %p189
    %p191 = pneg %p190
    // Predicated region
    $region37: #{time_predicter_forward.1} parent=5 // pred_check
      _
    $region38: #{time_predicter_forward.1} parent=5 // pred_check_branch
      %193 = sbr.rel (%p190) target = $region40
    $region39: #{time_predicter_forward.1} parent=5 // pred_region
      %s194 = ssub.s32 %s12, 1
      %s195 = smul.u32 4, %s17
      %p196 = scmp.lt.s32.totalorder %s195, 7
      %s197 = scalar_select %p196, %s195, 7
      %s198 = smul.addr %s197, 8
      %s199 = scalar_lea.vmem %s0, %s198
      %p200 = pneg %p38
      %p201 = pneg %p35
      %p202 = pneg %p59
      %p203 = pneg %p56
      %p204 = pneg %p80
      %p205 = pneg %p77
      %p206 = pneg %p101
      %p207 = pneg %p98
      %p208 = pneg %p122
      %p209 = pneg %p119
      %p210 = pneg %p148
      %p211 = pneg %p145
      %s212 = smul.u32 4, %s17
      %p213 = scmp.lt.s32.totalorder %s212, 7
      %s214 = scalar_select %p213, %s212, 7
      %s215 = smul.addr %s214, 8
      %s216 = scalar_lea.vmem %s5, %s215
      %s217 = smul.u32 4, %s17
      %p218 = scmp.lt.s32.totalorder %s217, 7
      %s219 = scalar_select %p218, %s217, 7
      %s220 = smul.addr %s219, 8
      %s221 = scalar_lea.vmem %s0, %s220
      %s222 = smul.u32 4, %s17
      %s223 = smul.u32 4, %s17
      %p224 = scmp.lt.s32.totalorder %s223, 7
      %s225 = scalar_select %p224, %s223, 7
      %s226 = smul.addr %s225, 8
      %s227 = scalar_lea.vmem %s5, %s226
      %s228 = smul.u32 4, %s17
      %v229 = vld [vmem:[%s221] sm:$0xff]
      %v230 = vld [vmem:[%s221 + $0x8] sm:$0xff]
      %v231 = vld [vmem:[%s221 + $0x10] sm:$0xff]
      %v232 = vld [vmem:[%s221 + $0x18] sm:$0xff]
      %v233 = vld [vmem:[%s1] sm:$0xff]
      %v234 = vld [vmem:[%s1 + $0x8] sm:$0xff]
      %v235 = vld [vmem:[%s1 + $0x10] sm:$0xff]
      %v236 = vld [vmem:[%s1 + $0x18] sm:$0xff]
      %v237 = vld [vmem:[%s1 + $0x20] sm:$0xff]
      %v238 = vld [vmem:[%s1 + $0x28] sm:$0xff]
      %v239 = vld [vmem:[%s1 + $0x30] sm:$0xff]
      %v240 = vld [vmem:[%s1 + $0x38] sm:$0xff]
      %v241 = vld [vmem:[%s1 + $0x40] sm:$0xff]
      %v242 = vld [vmem:[%s1 + $0x48] sm:$0xff]
      %v243 = vld [vmem:[%s1 + $0x50] sm:$0xff]
      %v244 = vld [vmem:[%s1 + $0x58] sm:$0xff]
      %v245 = vld [vmem:[%s1 + $0x60] sm:$0xff]
      %v246 = vld [vmem:[%s1 + $0x68] sm:$0xff]
      %v247 = vld [vmem:[%s1 + $0x70] sm:$0xff]
      %v248 = vld [vmem:[%s1 + $0x78] sm:$0xff]
      %v249 = vld [vmem:[%s2] sm:$0x1]
      %v251 = vlaneseq
      %v252 = vshrl.u32 %v251, 7
      %v253 = vsub.s32 0, %v252
      %v254 = vrot.slane %v249, %v253
      %256 = vmatprep.subr.mxu0 0.0
      %257 = vmatpush1.msra.mxu0 %v248
      %258 = vmatprep.subr.mxu0 0.0
      %259 = vmatpush1.msra.mxu0 %v247
      %260 = vmatprep.subr.mxu0 0.0
      %261 = vmatpush1.msra.mxu0 %v246
      %262 = vmatprep.subr.mxu0 0.0
      %263 = vmatpush1.msra.mxu0 %v245
      %264 = vmatprep.subr.mxu0 0.0
      %265 = vmatpush1.msra.mxu0 %v244
      %266 = vmatprep.subr.mxu0 0.0
      %267 = vmatpush1.msra.mxu0 %v243
      %268 = vmatprep.subr.mxu0 0.0
      %269 = vmatpush1.msra.mxu0 %v242
      %270 = vmatprep.subr.mxu0 0.0
      %271 = vmatpush1.msra.mxu0 %v241
      %272 = vmatprep.subr.mxu0 0.0
      %273 = vmatpush1.msra.mxu0 %v240
      %274 = vmatprep.subr.mxu0 0.0
      %275 = vmatpush1.msra.mxu0 %v239
      %276 = vmatprep.subr.mxu0 0.0
      %277 = vmatpush1.msra.mxu0 %v238
      %278 = vmatprep.subr.mxu0 0.0
      %279 = vmatpush1.msra.mxu0 %v237
      %280 = vmatprep.subr.mxu0 0.0
      %281 = vmatpush1.msra.mxu0 %v236
      %282 = vmatprep.subr.mxu0 0.0
      %283 = vmatpush1.msra.mxu0 %v235
      %284 = vmatprep.subr.mxu0 0.0
      %285 = vmatpush1.msra.mxu0 %v234
      %286 = vmatprep.subr.mxu0 0.0
      %287 = vmatpush1.msra.mxu0 %v233
      %288 = vmatprep.subr.mxu0 0.0
      %289 = vmatpush2.msra.mxu0 0.0
      %290 = vmatprep.subr.mxu0 0.0
      %291 = vmatpush2.msra.mxu0 0.0
      %292 = vmatprep.subr.mxu0 0.0
      %293 = vmatpush2.msra.mxu0 0.0
      %294 = vmatprep.subr.mxu0 0.0
      %295 = vmatpush2.msra.mxu0 0.0
      %296 = vmatprep.subr.mxu0 0.0
      %297 = vmatpush2.msra.mxu0 0.0
      %298 = vmatprep.subr.mxu0 0.0
      %299 = vmatpush2.msra.mxu0 0.0
      %300 = vmatprep.subr.mxu0 0.0
      %301 = vmatpush2.msra.mxu0 0.0
      %302 = vmatprep.subr.mxu0 0.0
      %303 = vmatpush2.msra.mxu0 0.0
      %304 = vmatprep.subr.mxu0 0.0
      %305 = vmatpush2.msra.mxu0 0.0
      %306 = vmatprep.subr.mxu0 0.0
      %307 = vmatpush2.msra.mxu0 0.0
      %308 = vmatprep.subr.mxu0 0.0
      %309 = vmatpush2.msra.mxu0 0.0
      %310 = vmatprep.subr.mxu0 0.0
      %311 = vmatpush2.msra.mxu0 0.0
      %312 = vmatprep.subr.mxu0 0.0
      %313 = vmatpush2.msra.mxu0 0.0
      %314 = vmatprep.subr.mxu0 0.0
      %315 = vmatpush2.msra.mxu0 0.0
      %316 = vmatprep.subr.mxu0 0.0
      %317 = vmatpush2.msra.mxu0 0.0
      %318 = vmatprep.subr.mxu0 0.0
      %319 = vmatpush2.msra.mxu0 0.0
      %320 = vmatprep.mubr.f32.mxu0 0.0
      %321 = vmatmul.mubr.f32.gmra.mxu0 %v229
      %v322 = vpop.f32.mrf.mxu0
      %v323 = vadd.f32 %v254, %v322
      %v324 = vpop.f32.mrf.mxu0
      %325 = vmatprep.mubr.f32.mxu0 0.0
      %326 = vmatmul.mubr.f32.gmra.mxu0 %v230
      %v327 = vpop.f32.mrf.mxu0
      %v328 = vadd.f32 %v254, %v327
      %v329 = vpop.f32.mrf.mxu0
      %330 = vmatprep.mubr.f32.mxu0 0.0
      %331 = vmatmul.mubr.f32.gmra.mxu0 %v231
      %v332 = vpop.f32.mrf.mxu0
      %v333 = vadd.f32 %v254, %v332
      %v334 = vpop.f32.mrf.mxu0
      %335 = vmatprep.mubr.f32.mxu0 0.0
      %336 = vmatmul.mubr.f32.gmra.mxu0 %v232
      %v337 = vpop.f32.mrf.mxu0
      %v338 = vadd.f32 %v254, %v337
      %v339 = vpop.f32.mrf.mxu0
      %340 = vdwg.mxu0
      %v341 = vmax.f32 %v323, 0.0
      %v342 = vmax.f32 %v328, 0.0
      %v343 = vmax.f32 %v333, 0.0
      %v344 = vmax.f32 %v338, 0.0
      %v345 = vld [vmem:[%s3] sm:$0xff]
      %v346 = vld [vmem:[%s3 + $0x8] sm:$0xff]
      %v347 = vld [vmem:[%s3 + $0x10] sm:$0xff]
      %v348 = vld [vmem:[%s3 + $0x18] sm:$0xff]
      %v349 = vld [vmem:[%s3 + $0x20] sm:$0xff]
      %v350 = vld [vmem:[%s3 + $0x28] sm:$0xff]
      %v351 = vld [vmem:[%s3 + $0x30] sm:$0xff]
      %v352 = vld [vmem:[%s3 + $0x38] sm:$0xff]
      %v353 = vld [vmem:[%s3 + $0x40] sm:$0xff]
      %v354 = vld [vmem:[%s3 + $0x48] sm:$0xff]
      %v355 = vld [vmem:[%s3 + $0x50] sm:$0xff]
      %v356 = vld [vmem:[%s3 + $0x58] sm:$0xff]
      %v357 = vld [vmem:[%s3 + $0x60] sm:$0xff]
      %v358 = vld [vmem:[%s3 + $0x68] sm:$0xff]
      %v359 = vld [vmem:[%s3 + $0x70] sm:$0xff]
      %v360 = vld [vmem:[%s3 + $0x78] sm:$0xff]
      %s361 = sld [smem:[#allocation2]]
      %v362 = vstv %s361
      %363 = vmatprep.subr.mxu0 0.0
      %364 = vmatpush1.msra.mxu0 %v360
      %365 = vmatprep.subr.mxu0 0.0
      %366 = vmatpush1.msra.mxu0 %v359
      %367 = vmatprep.subr.mxu0 0.0
      %368 = vmatpush1.msra.mxu0 %v358
      %369 = vmatprep.subr.mxu0 0.0
      %370 = vmatpush1.msra.mxu0 %v357
      %371 = vmatprep.subr.mxu0 0.0
      %372 = vmatpush1.msra.mxu0 %v356
      %373 = vmatprep.subr.mxu0 0.0
      %374 = vmatpush1.msra.mxu0 %v355
      %375 = vmatprep.subr.mxu0 0.0
      %376 = vmatpush1.msra.mxu0 %v354
      %377 = vmatprep.subr.mxu0 0.0
      %378 = vmatpush1.msra.mxu0 %v353
      %379 = vmatprep.subr.mxu0 0.0
      %380 = vmatpush1.msra.mxu0 %v352
      %381 = vmatprep.subr.mxu0 0.0
      %382 = vmatpush1.msra.mxu0 %v351
      %383 = vmatprep.subr.mxu0 0.0
      %384 = vmatpush1.msra.mxu0 %v350
      %385 = vmatprep.subr.mxu0 0.0
      %386 = vmatpush1.msra.mxu0 %v349
      %387 = vmatprep.subr.mxu0 0.0
      %388 = vmatpush1.msra.mxu0 %v348
      %389 = vmatprep.subr.mxu0 0.0
      %390 = vmatpush1.msra.mxu0 %v347
      %391 = vmatprep.subr.mxu0 0.0
      %392 = vmatpush1.msra.mxu0 %v346
      %393 = vmatprep.subr.mxu0 0.0
      %394 = vmatpush1.msra.mxu0 %v345
      %395 = vmatprep.subr.mxu0 0.0
      %396 = vmatpush2.msra.mxu0 0.0
      %397 = vmatprep.subr.mxu0 0.0
      %398 = vmatpush2.msra.mxu0 0.0
      %399 = vmatprep.subr.mxu0 0.0
      %400 = vmatpush2.msra.mxu0 0.0
      %401 = vmatprep.subr.mxu0 0.0
      %402 = vmatpush2.msra.mxu0 0.0
      %403 = vmatprep.subr.mxu0 0.0
      %404 = vmatpush2.msra.mxu0 0.0
      %405 = vmatprep.subr.mxu0 0.0
      %406 = vmatpush2.msra.mxu0 0.0
      %407 = vmatprep.subr.mxu0 0.0
      %408 = vmatpush2.msra.mxu0 0.0
      %409 = vmatprep.subr.mxu0 0.0
      %410 = vmatpush2.msra.mxu0 0.0
      %411 = vmatprep.subr.mxu0 0.0
      %412 = vmatpush2.msra.mxu0 0.0
      %413 = vmatprep.subr.mxu0 0.0
      %414 = vmatpush2.msra.mxu0 0.0
      %415 = vmatprep.subr.mxu0 0.0
      %416 = vmatpush2.msra.mxu0 0.0
      %417 = vmatprep.subr.mxu0 0.0
      %418 = vmatpush2.msra.mxu0 0.0
      %419 = vmatprep.subr.mxu0 0.0
      %420 = vmatpush2.msra.mxu0 0.0
      %421 = vmatprep.subr.mxu0 0.0
      %422 = vmatpush2.msra.mxu0 0.0
      %423 = vmatprep.subr.mxu0 0.0
      %424 = vmatpush2.msra.mxu0 0.0
      %425 = vmatprep.subr.mxu0 0.0
      %426 = vmatpush2.msra.mxu0 0.0
      %427 = vmatprep.mubr.f32.mxu0 0.0
      %428 = vmatmul.mubr.f32.gmra.mxu0 %v341
      %v429 = vpop.f32.mrf.mxu0
      %v430 = vadd.f32 %v362, %v429
      %v431 = vpop.f32.mrf.mxu0
      %432 = vmatprep.mubr.f32.mxu0 0.0
      %433 = vmatmul.mubr.f32.gmra.mxu0 %v342
      %v434 = vpop.f32.mrf.mxu0
      %v435 = vadd.f32 %v362, %v434
      %v436 = vpop.f32.mrf.mxu0
      %437 = vmatprep.mubr.f32.mxu0 0.0
      %438 = vmatmul.mubr.f32.gmra.mxu0 %v343
      %v439 = vpop.f32.mrf.mxu0
      %v440 = vadd.f32 %v362, %v439
      %v441 = vpop.f32.mrf.mxu0
      %442 = vmatprep.mubr.f32.mxu0 0.0
      %443 = vmatmul.mubr.f32.gmra.mxu0 %v344
      %v444 = vpop.f32.mrf.mxu0
      %v445 = vadd.f32 %v362, %v444
      %v446 = vpop.f32.mrf.mxu0
      %447 = vdwg.mxu0
      %vm448 = vcmask 31744
      %449 = vst.msk [vmem:[%s227] sm:$0xff] %vm448, %v430
      %450 = vst.msk [vmem:[%s227 + $0x8] sm:$0xff] %vm448, %v435
      %451 = vst.msk [vmem:[%s227 + $0x10] sm:$0xff] %vm448, %v440
      %452 = vst.msk [vmem:[%s227 + $0x18] sm:$0xff] %vm448, %v445
      %s453 = smul.u32 4, %s17
      %p454 = scmp.lt.s32.totalorder %s453, 7
      %s455 = scalar_select %p454, %s453, 7
      %s456 = smul.addr %s455, 8
      %s457 = scalar_lea.vmem %s5, %s456
      // Predicated region
      $region41: #{time_predicter_forward.1} parent=39 // pred_check
        %p458 = pneg %p145
      $region42: #{time_predicter_forward.1} parent=39 // pred_check_branch
        %460 = sbr.rel (%p458) target = $region44
      $region43: #{time_predicter_forward.1} parent=39 // pred_region
        %s461 = smul.u32 4, %s17
      $region44: #{time_predicter_forward.1} parent=39 // pred_fallthru
        _
    $region40: #{time_predicter_forward.1} parent=5 // pred_fallthru
      _
    %p462 = scmp.le.s32.totalorder 2, %s12
    // Predicated region
    $region45: #{time_predicter_forward.1} parent=5 // pred_check
      %p463 = pneg %p462
    $region46: #{time_predicter_forward.1} parent=5 // pred_check_branch
      %465 = sbr.rel (%p463) target = $region48
    $region47: #{time_predicter_forward.1} parent=5 // pred_region
      %s466 = ssub.s32 %s12, 2
      // Predicated region
      $region49: #{time_predicter_forward.1} parent=47 // pred_check
        %p467 = pneg %p151
      $region50: #{time_predicter_forward.1} parent=47 // pred_check_branch
        %469 = sbr.rel (%p467) target = $region52
      $region51: #{time_predicter_forward.1} parent=47 // pred_region
        %s470 = smul.u32 4, %s18
        %p471 = scmp.lt.s32.totalorder %s470, 7
        %s472 = scalar_select %p471, %s470, 7
        %s473 = smul.addr %s472, 8
        %s474 = scalar_lea.vmem %s5, %s473
      $region52: #{time_predicter_forward.1} parent=47 // pred_fallthru
        _
    $region48: #{time_predicter_forward.1} parent=5 // pred_fallthru
      _
  $region6: #{time_predicter_forward.1} parent=0 // loop_footer
    %s16 = sadd.s32 1, %s12
  $region7: #{time_predicter_forward.1} parent=0 // loop_footer_branch
    %11 = sbr.rel target = $region3
  $region8: #{time_predicter_forward.1} parent=0 // loop_exit
    _

</llo_original>
